<compile_context>
chip_gen: v7x
topology: tpu7x:2x2x1
jax: 0.10.0
libtpu: 0.0.40
codegen_flags: <defaults>
</compile_context>

<pallas_src>
import jax
import jax.numpy as jnp
from jax.experimental import pallas as pl
from jax.experimental.pallas import tpu as pltpu

LATENT = 16    # EncoderNetwork.OUTPUT_SIZE (decoder input)
H1 = 25
H2 = 10
OUT = 64       # EncoderNetwork.INPUT_SIZE  (decoder output)

# Zero-padded hidden widths (exact math, see header).
H1P = 32
H2P = 16

_MIN_TILE_ROWS = 2048   # never shrink tiles below this for megacore balancing


def _round_up(n, m):
    return ((n + m - 1) // m) * m


def _default_pack():
    """Packing factor: 8 (fully lane-dense) except v5e, where 4 limits the
    f32 MXU flop blow-up on its weaker MXU while keeping stores lane-dense."""
    try:
        kind = jax.devices()[0].device_kind.lower()
    except Exception:
        kind = ""
    return 4 if "v5" in kind else 8


def decoder_kernel(x_ref, w1_ref, b1_ref, w2_ref, b2_ref, w3_ref, b3_ref, o_ref):
    # Fully fused hot path: 3 MXU matmuls + bias + ReLU, all in VMEM.
    h = jnp.dot(x_ref[...], w1_ref[...], preferred_element_type=jnp.float32) + b1_ref[...]
    h = jnp.maximum(h, 0.0)
    h = jnp.dot(h, w2_ref[...], preferred_element_type=jnp.float32) + b2_ref[...]
    h = jnp.maximum(h, 0.0)
    h = jnp.dot(h, w3_ref[...], preferred_element_type=jnp.float32) + b3_ref[...]
    h = jnp.maximum(h, 0.0)
    o_ref[...] = h.astype(o_ref.dtype)


def _jnp_forward(x, p):
    # Small-batch short circuit: identical math, no Pallas launch overhead.
    h = jnp.maximum(x @ p["w1"].T + p["b1"], 0.0)
    h = jnp.maximum(h @ p["w2"].T + p["b2"], 0.0)
    h = jnp.maximum(h @ p["w3"].T + p["b3"], 0.0)
    return h


def _block_diag(w, pack):
    """(in, out) -> (pack*in, pack*out) block-diagonal replication."""
    i, o = w.shape
    eye = jnp.eye(pack, dtype=w.dtype)
    return (eye[:, None, :, None] * w[None, :, None, :]).reshape(pack * i, pack * o)


def _pack_params(params, pack):
    """Transpose to (in, out), zero-pad hidden dims, build block-diagonal
    packed weights and tiled biases."""
    w1p = jnp.zeros((LATENT, H1P), jnp.float32).at[:, :H1].set(params["w1"].T.astype(jnp.float32))
    w2p = jnp.zeros((H1P, H2P), jnp.float32).at[:H1, :H2].set(params["w2"].T.astype(jnp.float32))
    w3p = jnp.zeros((H2P, OUT), jnp.float32).at[:H2, :].set(params["w3"].T.astype(jnp.float32))
    b1p = jnp.zeros((H1P,), jnp.float32).at[:H1].set(params["b1"].astype(jnp.float32))
    b2p = jnp.zeros((H2P,), jnp.float32).at[:H2].set(params["b2"].astype(jnp.float32))
    b3p = params["b3"].astype(jnp.float32)

    w1 = _block_diag(w1p, pack)
    w2 = _block_diag(w2p, pack)
    w3 = _block_diag(w3p, pack)
    b1 = jnp.tile(b1p, pack).reshape(1, pack * H1P)
    b2 = jnp.tile(b2p, pack).reshape(1, pack * H2P)
    b3 = jnp.tile(b3p, pack).reshape(1, pack * OUT)
    return w1, b1, w2, b2, w3, b3


def decoder_forward(x, params, *, batch_tile=8192, pack=None, use_pallas=None):
    """x: (B, LATENT) float32.  params: PyTorch-layout weights (out_f, in_f)."""
    B, F = x.shape
    assert F == LATENT

    if use_pallas is None:
        # Traffic-based switch: below ~4K rows (~1.25 MiB total HBM traffic)
        # Pallas launch + per-step overhead loses to XLA's fused matmul path.
        use_pallas = B >= 4096
    if not use_pallas:
        return _jnp_forward(x, params)

    if pack is None:
        pack = _default_pack()
    pack_align = 8 * pack                      # rows per (sublane x pack) granule

    # --- tile / grid selection --------------------------------------------
    b_al = _round_up(max(B, pack_align), pack_align)
    tile = _round_up(min(batch_tile, b_al), pack_align)
    grid_n = pl.cdiv(b_al, tile)
    # Megacore (v7x): prefer an even step count so the "parallel" axis splits
    # evenly across both TensorCores -- but never below _MIN_TILE_ROWS/tile.
    if grid_n > 1 and grid_n % 2 == 1:
        tile_even = _round_up(pl.cdiv(b_al, grid_n + 1), pack_align)
        if tile_even >= _MIN_TILE_ROWS:
            tile = tile_even
            grid_n = pl.cdiv(b_al, tile)
    b_pad = grid_n * tile
    tile_p = tile // pack                      # packed rows per grid step

    if b_pad != B:
        x = jnp.pad(x, ((0, b_pad - B), (0, 0)))

    # Free row-major reinterpretation: (b_pad, 16) -> (b_pad/pack, pack*16).
    x_packed = x.reshape(b_pad // pack, pack * LATENT)

    w1, b1, w2, b2, w3, b3 = _pack_params(params, pack)

    k1, n1 = pack * LATENT, pack * H1P
    k2, n2 = n1, pack * H2P
    k3, n3 = n2, pack * OUT

    # Grid-invariant blocks: constant index_map -> the pipeline does not
    # re-issue their DMAs between steps (resident footprint < 1 MiB).
    full = lambda shape: pl.BlockSpec(shape, lambda i: (0, 0))

    n_packed = b_pad // pack
    flops = 2 * n_packed * (k1 * n1 + k2 * n2 + k3 * n3)
    bytes_accessed = 4 * (
        n_packed * (k1 + n3)                    # activations in / out (padded, packed)
        + k1 * n1 + k2 * n2 + k3 * n3           # block-diagonal weights
        + n1 + n2 + n3                          # biases
    )
    cost = pl.CostEstimate(flops=flops, transcendentals=0,
                           bytes_accessed=bytes_accessed)

    out_packed = pl.pallas_call(
        decoder_kernel,
        out_shape=jax.ShapeDtypeStruct((n_packed, n3), jnp.float32),
        grid_spec=pltpu.PrefetchScalarGridSpec(
            num_scalar_prefetch=0,
            grid=(grid_n,),
            in_specs=[
                pl.BlockSpec((tile_p, k1), lambda i: (i, 0)),   # packed x tile
                full((k1, n1)), full((1, n1)),
                full((k2, n2)), full((1, n2)),
                full((k3, n3)), full((1, n3)),
            ],
            out_specs=pl.BlockSpec((tile_p, n3), lambda i: (i, 0)),
        ),
        compiler_params=pltpu.CompilerParams(
            dimension_semantics=("parallel",),
            vmem_limit_bytes=32 * 1024 * 1024,
        ),
        cost_estimate=cost,
    )(x_packed, w1, b1, w2, b2, w3, b3)

    # Free reinterpretation back to (b_pad, OUT), then drop padded rows.
    return out_packed.reshape(b_pad, OUT)[:B]


def init_params(key):
    """Deterministic init; PyTorch Linear weight layout (out_features, in_features)."""
    ks = jax.random.split(key, 6)

    def lin(kw, kb, fan_in, fan_out):
        bound = 1.0 / jnp.sqrt(fan_in)
        w = jax.random.uniform(kw, (fan_out, fan_in), jnp.float32, -bound, bound)
        b = jax.random.uniform(kb, (fan_out,), jnp.float32, -bound, bound)
        return w, b

    w1, b1 = lin(ks[0], ks[1], LATENT, H1)
    w2, b2 = lin(ks[2], ks[3], H1, H2)
    w3, b3 = lin(ks[4], ks[5], H2, OUT)
    return {"w1": w1, "b1": b1, "w2": w2, "b2": b2, "w3": w3, "b3": b3}


def reference_forward(x, p):
    h = jnp.maximum(x @ p["w1"].T + p["b1"], 0.0)
    h = jnp.maximum(h @ p["w2"].T + p["b2"], 0.0)
    h = jnp.maximum(h @ p["w3"].T + p["b3"], 0.0)
    return h


if __name__ == "__main__":
    key = jax.random.PRNGKey(0)
    k_x, k_p = jax.random.split(key)
    params = init_params(k_p)

    # Small deterministic example; force the Pallas path to exercise the kernel.
    B = 256
    x = jax.random.normal(k_x, (B, LATENT), dtype=jnp.float32)
    ref = reference_forward(x, params)

    out = jax.block_until_ready(decoder_forward(x, params, use_pallas=True))
    assert out.shape == (B, OUT)
    assert jnp.allclose(out, ref, atol=1e-4, rtol=1e-4), "pallas path mismatch"

    # Odd batch size still goes through the kernel correctly (row padding + slice).
    out_odd = jax.block_until_ready(decoder_forward(x[:72], params, use_pallas=True))
    assert jnp.allclose(out_odd, ref[:72], atol=1e-4, rtol=1e-4), "padded batch mismatch"

    # Tiny batch auto short-circuits to the plain jnp path.
    out_small = jax.block_until_ready(decoder_forward(x[:4], params))
    assert jnp.allclose(out_small, ref[:4], atol=1e-4, rtol=1e-4), "fallback mismatch"

    print("KERNEL_OK")
</pallas_src>

<mosaic_0001>
module attributes {stable_mosaic.version = 11 : i64} {
  func.func @decoder_kernel(%arg0: i32, %arg1: memref<32x128xf32, #tpu.memory_space<vmem>>, %arg2: memref<128x256xf32, #tpu.memory_space<vmem>>, %arg3: memref<1x256xf32, #tpu.memory_space<vmem>>, %arg4: memref<256x128xf32, #tpu.memory_space<vmem>>, %arg5: memref<1x128xf32, #tpu.memory_space<vmem>>, %arg6: memref<128x512xf32, #tpu.memory_space<vmem>>, %arg7: memref<1x512xf32, #tpu.memory_space<vmem>>, %arg8: memref<32x512xf32, #tpu.memory_space<vmem>>) attributes {dimension_semantics = [#tpu.dimension_semantics<parallel>], iteration_bounds = array<i64: 1>, scalar_prefetch = 0 : i64, scratch_operands = 0 : i64, tpu.core_type = #tpu.core_type<tc>, window_params = [{transform_indices = @transform_0, window_bounds = array<i64: 32, 128>}, {pipeline_mode = #tpu.pipeline_mode<synchronous>, transform_indices = @transform_1, window_bounds = array<i64: 128, 256>}, {pipeline_mode = #tpu.pipeline_mode<synchronous>, transform_indices = @transform_2, window_bounds = array<i64: 1, 256>}, {pipeline_mode = #tpu.pipeline_mode<synchronous>, transform_indices = @transform_3, window_bounds = array<i64: 256, 128>}, {pipeline_mode = #tpu.pipeline_mode<synchronous>, transform_indices = @transform_4, window_bounds = array<i64: 1, 128>}, {pipeline_mode = #tpu.pipeline_mode<synchronous>, transform_indices = @transform_5, window_bounds = array<i64: 128, 512>}, {pipeline_mode = #tpu.pipeline_mode<synchronous>, transform_indices = @transform_6, window_bounds = array<i64: 1, 512>}, {transform_indices = @transform_7, window_bounds = array<i64: 32, 512>}]} {
    %c0 = arith.constant 0 : index
    %c0_0 = arith.constant 0 : index
    %0 = vector.load %arg1[%c0, %c0_0] : memref<32x128xf32, #tpu.memory_space<vmem>>, vector<32x128xf32>
    %c0_1 = arith.constant 0 : index
    %c0_2 = arith.constant 0 : index
    %1 = vector.load %arg2[%c0_1, %c0_2] : memref<128x256xf32, #tpu.memory_space<vmem>>, vector<128x256xf32>
    %cst = arith.constant dense<0.000000e+00> : vector<32x256xf32>
    %2 = tpu.matmul %0, %1, %cst {dimension_numbers = #tpu.dot_dimension_numbers<[1], [0], [0], [1], [0, 0, 1, 1], [], []>} : vector<32x128xf32>, vector<128x256xf32>, vector<32x256xf32> -> vector<32x256xf32>
    %c0_3 = arith.constant 0 : index
    %c0_4 = arith.constant 0 : index
    %3 = vector.load %arg3[%c0_3, %c0_4] : memref<1x256xf32, #tpu.memory_space<vmem>>, vector<1x256xf32>
    %4 = vector.broadcast %3 : vector<1x256xf32> to vector<32x256xf32>
    %5 = arith.addf %2, %4 : vector<32x256xf32>
    %cst_5 = arith.constant 0.000000e+00 : f32
    %6 = vector.broadcast %cst_5 : f32 to vector<32x256xf32>
    %7 = arith.maximumf %5, %6 : vector<32x256xf32>
    %c0_6 = arith.constant 0 : index
    %c0_7 = arith.constant 0 : index
    %8 = vector.load %arg4[%c0_6, %c0_7] : memref<256x128xf32, #tpu.memory_space<vmem>>, vector<256x128xf32>
    %cst_8 = arith.constant dense<0.000000e+00> : vector<32x128xf32>
    %9 = tpu.matmul %7, %8, %cst_8 {dimension_numbers = #tpu.dot_dimension_numbers<[1], [0], [0], [1], [0, 0, 1, 1], [], []>} : vector<32x256xf32>, vector<256x128xf32>, vector<32x128xf32> -> vector<32x128xf32>
    %c0_9 = arith.constant 0 : index
    %c0_10 = arith.constant 0 : index
    %10 = vector.load %arg5[%c0_9, %c0_10] : memref<1x128xf32, #tpu.memory_space<vmem>>, vector<1x128xf32>
    %11 = vector.broadcast %10 : vector<1x128xf32> to vector<32x128xf32>
    %12 = arith.addf %9, %11 : vector<32x128xf32>
    %cst_11 = arith.constant 0.000000e+00 : f32
    %13 = vector.broadcast %cst_11 : f32 to vector<32x128xf32>
    %14 = arith.maximumf %12, %13 : vector<32x128xf32>
    %c0_12 = arith.constant 0 : index
    %c0_13 = arith.constant 0 : index
    %15 = vector.load %arg6[%c0_12, %c0_13] : memref<128x512xf32, #tpu.memory_space<vmem>>, vector<128x512xf32>
    %cst_14 = arith.constant dense<0.000000e+00> : vector<32x512xf32>
    %16 = tpu.matmul %14, %15, %cst_14 {dimension_numbers = #tpu.dot_dimension_numbers<[1], [0], [0], [1], [0, 0, 1, 1], [], []>} : vector<32x128xf32>, vector<128x512xf32>, vector<32x512xf32> -> vector<32x512xf32>
    %c0_15 = arith.constant 0 : index
    %c0_16 = arith.constant 0 : index
    %17 = vector.load %arg7[%c0_15, %c0_16] : memref<1x512xf32, #tpu.memory_space<vmem>>, vector<1x512xf32>
    %18 = vector.broadcast %17 : vector<1x512xf32> to vector<32x512xf32>
    %19 = arith.addf %16, %18 : vector<32x512xf32>
    %cst_17 = arith.constant 0.000000e+00 : f32
    %20 = vector.broadcast %cst_17 : f32 to vector<32x512xf32>
    %21 = arith.maximumf %19, %20 : vector<32x512xf32>
    %c0_18 = arith.constant 0 : index
    %c0_19 = arith.constant 0 : index
    %22 = vector.load %arg8[%c0_18, %c0_19] : memref<32x512xf32, #tpu.memory_space<vmem>>, vector<32x512xf32>
    tpu.vector_store %arg8[%c0_18, %c0_19], %21 {strides = array<i32>} : memref<32x512xf32, #tpu.memory_space<vmem>>, vector<32x512xf32>,
    return
  }
  func.func @transform_0(%arg0: i32) -> (i32, i32) {
    %c0_i32 = arith.constant 0 : i32
    %c0_i32_0 = arith.constant 0 : i32
    return %arg0, %c0_i32 : i32, i32
  }
  func.func @transform_1(%arg0: i32) -> (i32, i32) {
    %c0_i32 = arith.constant 0 : i32
    %c0_i32_0 = arith.constant 0 : i32
    %c0_i32_1 = arith.constant 0 : i32
    return %c0_i32, %c0_i32_0 : i32, i32
  }
  func.func @transform_2(%arg0: i32) -> (i32, i32) {
    %c0_i32 = arith.constant 0 : i32
    %c0_i32_0 = arith.constant 0 : i32
    %c0_i32_1 = arith.constant 0 : i32
    return %c0_i32, %c0_i32_0 : i32, i32
  }
  func.func @transform_3(%arg0: i32) -> (i32, i32) {
    %c0_i32 = arith.constant 0 : i32
    %c0_i32_0 = arith.constant 0 : i32
    %c0_i32_1 = arith.constant 0 : i32
    return %c0_i32, %c0_i32_0 : i32, i32
  }
  func.func @transform_4(%arg0: i32) -> (i32, i32) {
    %c0_i32 = arith.constant 0 : i32
    %c0_i32_0 = arith.constant 0 : i32
    %c0_i32_1 = arith.constant 0 : i32
    return %c0_i32, %c0_i32_0 : i32, i32
  }
  func.func @transform_5(%arg0: i32) -> (i32, i32) {
    %c0_i32 = arith.constant 0 : i32
    %c0_i32_0 = arith.constant 0 : i32
    %c0_i32_1 = arith.constant 0 : i32
    return %c0_i32, %c0_i32_0 : i32, i32
  }
  func.func @transform_6(%arg0: i32) -> (i32, i32) {
    %c0_i32 = arith.constant 0 : i32
    %c0_i32_0 = arith.constant 0 : i32
    %c0_i32_1 = arith.constant 0 : i32
    return %c0_i32, %c0_i32_0 : i32, i32
  }
  func.func @transform_7(%arg0: i32) -> (i32, i32) {
    %c0_i32 = arith.constant 0 : i32
    %c0_i32_0 = arith.constant 0 : i32
    return %arg0, %c0_i32 : i32, i32
  }
}

</mosaic_0001>

<llo_original>
// kernel: tpu_custom_call.1
$region0: #{tpu_custom_call.1}
  #allocation0 [shape = 'u32[]', space=smem, size = 0x4, offset = 0x4, fixed_abs, tag = 'smem constant byte address 0x4 - core index']
  #allocation1 [shape = 'u32[144,128]{1,0:T(1,128)}', space=vmem, size = 0x12000, scoped, tag = 'internal scratch']
  %s0 = inlined_call_operand.hbm [shape: f32[32,128], index: 0, kind: input, shape index: {}]
  %s1 = inlined_call_operand.hbm [shape: f32[128,256], index: 1, kind: input, shape index: {}]
  %s2 = inlined_call_operand.vmem [shape: f32[1,256], index: 2, kind: input, shape index: {}]
  %s3 = inlined_call_operand.hbm [shape: f32[256,128], index: 3, kind: input, shape index: {}]
  %s4 = inlined_call_operand.vmem [shape: f32[1,128], index: 4, kind: input, shape index: {}]
  %s5 = inlined_call_operand.hbm [shape: f32[128,512], index: 5, kind: input, shape index: {}]
  %s6 = inlined_call_operand.vmem [shape: f32[1,512], index: 6, kind: input, shape index: {}]
  %s7 = inlined_call_operand.hbm [shape: f32[32,512], index: 7, kind: output, shape index: {}]
  %s8 = sld [smem:[#allocation0]]
  $region54: #{tpu_custom_call.1} parent=0
    _
  %s10 = ssub.s32 1, %s8
  %s11 = scalar_select 0, %s10, %s8
  $region1: #{tpu_custom_call.1} parent=0
    #allocation2 [shape = 'u8[16384]{0}', space=vmem, size = 0x4000, scoped, tag = 'input window, operand 0, single buffered']
    #allocation3 [shape = 's32[1]{0}', space=sflag, size = 0x4, scoped, tag = 'scoped memory for tpu_custom_call.1']
    #allocation4 [shape = 's32[1]{0}', space=sflag, size = 0x4, scoped, tag = 'scoped memory for tpu_custom_call.1']
    #allocation5 [shape = 'u8[131072]{0}', space=vmem, size = 0x20000, scoped, tag = 'input window, operand 1, single buffered']
    #allocation6 [shape = 's32[1]{0}', space=sflag, size = 0x4, scoped, tag = 'scoped memory for tpu_custom_call.1']
    #allocation7 [shape = 'u8[131072]{0}', space=vmem, size = 0x20000, scoped, tag = 'input window, operand 3, single buffered']
    #allocation8 [shape = 'u8[262144]{0}', space=vmem, size = 0x40000, scoped, tag = 'input window, operand 5, single buffered']
    #allocation9 [shape = 's32[1]{0}', space=sflag, size = 0x4, scoped, tag = 'scoped memory for tpu_custom_call.1']
    #allocation10 [shape = 'u8[65536]{0}', space=vmem, size = 0x10000, scoped, tag = 'output window, operand 0, single buffered']
    %12 = vsyncpa [#allocation3], 0
    %13 = vsyncpa [#allocation6], 0
    %14 = vsyncpa [#allocation9], 0
    %15 = vsyncpa [#allocation4], 0
    // Predicated region
    $region2: #{tpu_custom_call.1} parent=1 // pred_check
      _
    $region3: #{tpu_custom_call.1} parent=1 // pred_check_branch
      %17 = sbr.rel (0) target = $region5
    $region4: #{tpu_custom_call.1} parent=1 // pred_region
      %s19 = ssub.s32 512, 512
      %20 = vsyncadd [#allocation3], %s19
      %s21 = sshll.u32 [#allocation2], 4
      %s22 = int_to_ptr.vmem [resolvable:$true] %s21
      %27 = dma.hbm_to_vmem [thread:$0]  %s0, 512, %s22, [#allocation3], 128, 128, 8
    $region5: #{tpu_custom_call.1} parent=1 // pred_fallthru
      _
    // Predicated region
    $region6: #{tpu_custom_call.1} parent=1 // pred_check
      _
    $region7: #{tpu_custom_call.1} parent=1 // pred_check_branch
      %29 = sbr.rel (0) target = $region9
    $region8: #{tpu_custom_call.1} parent=1 // pred_region
      %s31 = ssub.s32 4096, 4096
      %32 = vsyncadd [#allocation6], %s31
      %s33 = sshll.u32 [#allocation5], 4
      %s34 = int_to_ptr.vmem [resolvable:$true] %s33
      %39 = dma.hbm_to_vmem [thread:$0]  %s1, 4096, %s34, [#allocation6], 256, 256, 16
    $region9: #{tpu_custom_call.1} parent=1 // pred_fallthru
      _
    // Predicated region
    $region10: #{tpu_custom_call.1} parent=1 // pred_check
      _
    $region11: #{tpu_custom_call.1} parent=1 // pred_check_branch
      %41 = sbr.rel (0) target = $region13
    $region12: #{tpu_custom_call.1} parent=1 // pred_region
      _
    $region13: #{tpu_custom_call.1} parent=1 // pred_fallthru
      _
    // Predicated region
    $region14: #{tpu_custom_call.1} parent=1 // pred_check
      _
    $region15: #{tpu_custom_call.1} parent=1 // pred_check_branch
      %43 = sbr.rel (0) target = $region17
    $region16: #{tpu_custom_call.1} parent=1 // pred_region
      %s45 = ssub.s32 4096, 4096
      %46 = vsyncadd [#allocation6], %s45
      %s47 = sshll.u32 [#allocation7], 4
      %s48 = int_to_ptr.vmem [resolvable:$true] %s47
      %53 = dma.hbm_to_vmem [thread:$0]  %s3, 4096, %s48, [#allocation6], 128, 128, 8
    $region17: #{tpu_custom_call.1} parent=1 // pred_fallthru
      _
    // Predicated region
    $region18: #{tpu_custom_call.1} parent=1 // pred_check
      _
    $region19: #{tpu_custom_call.1} parent=1 // pred_check_branch
      %55 = sbr.rel (0) target = $region21
    $region20: #{tpu_custom_call.1} parent=1 // pred_region
      _
    $region21: #{tpu_custom_call.1} parent=1 // pred_fallthru
      _
    // Predicated region
    $region22: #{tpu_custom_call.1} parent=1 // pred_check
      _
    $region23: #{tpu_custom_call.1} parent=1 // pred_check_branch
      %57 = sbr.rel (0) target = $region25
    $region24: #{tpu_custom_call.1} parent=1 // pred_region
      %s59 = ssub.s32 8192, 8192
      %60 = vsyncadd [#allocation9], %s59
      %s61 = sshll.u32 [#allocation8], 4
      %s62 = int_to_ptr.vmem [resolvable:$true] %s61
      %67 = dma.hbm_to_vmem [thread:$0]  %s5, 8192, %s62, [#allocation9], 512, 512, 32
    $region25: #{tpu_custom_call.1} parent=1 // pred_fallthru
      _
    // Predicated region
    $region26: #{tpu_custom_call.1} parent=1 // pred_check
      _
    $region27: #{tpu_custom_call.1} parent=1 // pred_check_branch
      %69 = sbr.rel (0) target = $region29
    $region28: #{tpu_custom_call.1} parent=1 // pred_region
      _
    $region29: #{tpu_custom_call.1} parent=1 // pred_fallthru
      _
    // Predicated region
    $region30: #{tpu_custom_call.1} parent=1 // pred_check
      _
    $region31: #{tpu_custom_call.1} parent=1 // pred_check_branch
      %71 = sbr.rel (0) target = $region33
    $region32: #{tpu_custom_call.1} parent=1 // pred_region
      %72 = dma.done [#allocation3], 512
    $region33: #{tpu_custom_call.1} parent=1 // pred_fallthru
      _
    // Predicated region
    $region34: #{tpu_custom_call.1} parent=1 // pred_check
      _
    $region35: #{tpu_custom_call.1} parent=1 // pred_check_branch
      %74 = sbr.rel (0) target = $region37
    $region36: #{tpu_custom_call.1} parent=1 // pred_region
      %75 = dma.done [#allocation6], 4096
    $region37: #{tpu_custom_call.1} parent=1 // pred_fallthru
      _
    // Predicated region
    $region38: #{tpu_custom_call.1} parent=1 // pred_check
      _
    $region39: #{tpu_custom_call.1} parent=1 // pred_check_branch
      %77 = sbr.rel (0) target = $region41
    $region40: #{tpu_custom_call.1} parent=1 // pred_region
      %78 = dma.done [#allocation6], 4096
    $region41: #{tpu_custom_call.1} parent=1 // pred_fallthru
      _
    // Predicated region
    $region42: #{tpu_custom_call.1} parent=1 // pred_check
      _
    $region43: #{tpu_custom_call.1} parent=1 // pred_check_branch
      %80 = sbr.rel (0) target = $region45
    $region44: #{tpu_custom_call.1} parent=1 // pred_region
      %81 = dma.done [#allocation9], 8192
    $region45: #{tpu_custom_call.1} parent=1 // pred_fallthru
      _
    %v82 = vld [vmem:[#allocation2] sm:$0xff]
    %v83 = vld [vmem:[#allocation2 + $0x8] sm:$0xff]
    %v84 = vld [vmem:[#allocation2 + $0x10] sm:$0xff]
    %v85 = vld [vmem:[#allocation2 + $0x18] sm:$0xff]
    %v86 = vld [vmem:[#allocation5] sm:$0xff]
    %v87 = vld [vmem:[#allocation5 + $0x8] sm:$0xff]
    %v88 = vld [vmem:[#allocation5 + $0x10] sm:$0xff]
    %v89 = vld [vmem:[#allocation5 + $0x18] sm:$0xff]
    %v90 = vld [vmem:[#allocation5 + $0x20] sm:$0xff]
    %v91 = vld [vmem:[#allocation5 + $0x28] sm:$0xff]
    %v92 = vld [vmem:[#allocation5 + $0x30] sm:$0xff]
    %v93 = vld [vmem:[#allocation5 + $0x38] sm:$0xff]
    %v94 = vld [vmem:[#allocation5 + $0x40] sm:$0xff]
    %v95 = vld [vmem:[#allocation5 + $0x48] sm:$0xff]
    %v96 = vld [vmem:[#allocation5 + $0x50] sm:$0xff]
    %v97 = vld [vmem:[#allocation5 + $0x58] sm:$0xff]
    %v98 = vld [vmem:[#allocation5 + $0x60] sm:$0xff]
    %v99 = vld [vmem:[#allocation5 + $0x68] sm:$0xff]
    %v100 = vld [vmem:[#allocation5 + $0x70] sm:$0xff]
    %v101 = vld [vmem:[#allocation5 + $0x78] sm:$0xff]
    %v102 = vld [vmem:[#allocation5 + $0x80] sm:$0xff]
    %v103 = vld [vmem:[#allocation5 + $0x88] sm:$0xff]
    %v104 = vld [vmem:[#allocation5 + $0x90] sm:$0xff]
    %v105 = vld [vmem:[#allocation5 + $0x98] sm:$0xff]
    %v106 = vld [vmem:[#allocation5 + $0xa0] sm:$0xff]
    %v107 = vld [vmem:[#allocation5 + $0xa8] sm:$0xff]
    %v108 = vld [vmem:[#allocation5 + $0xb0] sm:$0xff]
    %v109 = vld [vmem:[#allocation5 + $0xb8] sm:$0xff]
    %v110 = vld [vmem:[#allocation5 + $0xc0] sm:$0xff]
    %v111 = vld [vmem:[#allocation5 + $0xc8] sm:$0xff]
    %v112 = vld [vmem:[#allocation5 + $0xd0] sm:$0xff]
    %v113 = vld [vmem:[#allocation5 + $0xd8] sm:$0xff]
    %v114 = vld [vmem:[#allocation5 + $0xe0] sm:$0xff]
    %v115 = vld [vmem:[#allocation5 + $0xe8] sm:$0xff]
    %v116 = vld [vmem:[#allocation5 + $0xf0] sm:$0xff]
    %v117 = vld [vmem:[#allocation5 + $0xf8] sm:$0xff]
    %v118 = vld [vmem:[%s2] sm:$0x3]
    %v120 = vlaneseq
    %v121 = vshrl.u32 %v120, 7
    %v122 = vsub.s32 0, %v121
    %v123 = vrot.slane %v118, %v122
    %v124 = vlaneseq
    %v125 = vshrl.u32 %v124, 7
    %v126 = vsub.s32 1, %v125
    %v127 = vrot.slane %v118, %v126
    %130 = vmatprep.subr.mxu0 %v87
    %131 = vmatpush1.msra.mxu0 %v86
    %132 = vmatprep.subr.mxu0 %v89
    %133 = vmatpush1.msra.mxu0 %v88
    %134 = vmatprep.subr.mxu0 %v91
    %135 = vmatpush1.msra.mxu0 %v90
    %136 = vmatprep.subr.mxu0 %v93
    %137 = vmatpush1.msra.mxu0 %v92
    %138 = vmatprep.subr.mxu0 %v95
    %139 = vmatpush1.msra.mxu0 %v94
    %140 = vmatprep.subr.mxu0 %v97
    %141 = vmatpush1.msra.mxu0 %v96
    %142 = vmatprep.subr.mxu0 %v99
    %143 = vmatpush1.msra.mxu0 %v98
    %144 = vmatprep.subr.mxu0 %v101
    %145 = vmatpush1.msra.mxu0 %v100
    %146 = vmatprep.subr.mxu0 %v103
    %147 = vmatpush1.msra.mxu0 %v102
    %148 = vmatprep.subr.mxu0 %v105
    %149 = vmatpush1.msra.mxu0 %v104
    %150 = vmatprep.subr.mxu0 %v107
    %151 = vmatpush1.msra.mxu0 %v106
    %152 = vmatprep.subr.mxu0 %v109
    %153 = vmatpush1.msra.mxu0 %v108
    %154 = vmatprep.subr.mxu0 %v111
    %155 = vmatpush1.msra.mxu0 %v110
    %156 = vmatprep.subr.mxu0 %v113
    %157 = vmatpush1.msra.mxu0 %v112
    %158 = vmatprep.subr.mxu0 %v115
    %159 = vmatpush1.msra.mxu0 %v114
    %160 = vmatprep.subr.mxu0 %v117
    %161 = vmatpush1.msra.mxu0 %v116
    %162 = vmatprep.subr.mxu0 0.0
    %163 = vmatpush1.msra.mxu0 0.0
    %164 = vmatprep.subr.mxu0 0.0
    %165 = vmatpush1.msra.mxu0 0.0
    %166 = vmatprep.subr.mxu0 0.0
    %167 = vmatpush1.msra.mxu0 0.0
    %168 = vmatprep.subr.mxu0 0.0
    %169 = vmatpush1.msra.mxu0 0.0
    %170 = vmatprep.subr.mxu0 0.0
    %171 = vmatpush1.msra.mxu0 0.0
    %172 = vmatprep.subr.mxu0 0.0
    %173 = vmatpush1.msra.mxu0 0.0
    %174 = vmatprep.subr.mxu0 0.0
    %175 = vmatpush1.msra.mxu0 0.0
    %176 = vmatprep.subr.mxu0 0.0
    %177 = vmatpush1.msra.mxu0 0.0
    %178 = vmatprep.subr.mxu0 0.0
    %179 = vmatpush1.msra.mxu0 0.0
    %180 = vmatprep.subr.mxu0 0.0
    %181 = vmatpush1.msra.mxu0 0.0
    %182 = vmatprep.subr.mxu0 0.0
    %183 = vmatpush1.msra.mxu0 0.0
    %184 = vmatprep.subr.mxu0 0.0
    %185 = vmatpush1.msra.mxu0 0.0
    %186 = vmatprep.subr.mxu0 0.0
    %187 = vmatpush1.msra.mxu0 0.0
    %188 = vmatprep.subr.mxu0 0.0
    %189 = vmatpush1.msra.mxu0 0.0
    %190 = vmatprep.subr.mxu0 0.0
    %191 = vmatpush1.msra.mxu0 0.0
    %192 = vmatprep.subr.mxu0 0.0
    %193 = vmatpush1.msra.mxu0 0.0
    %194 = vmatprep.mubr.f32.mxu0 0.0
    %195 = vmatmul.mubr.f32.gmra.mrb[0].mxu0 %v82
    %v196 = vpop.f32.mrb[0].mxu0
    %v197 = vadd.f32 %v123, %v196
    %v198 = vpop.f32.mrb[0].mxu0
    %v199 = vadd.f32 %v127, %v198
    %200 = vmatprep.mubr.f32.mxu0 0.0
    %201 = vmatmul.mubr.f32.gmra.mrb[0].mxu0 %v83
    %v202 = vpop.f32.mrb[0].mxu0
    %v203 = vadd.f32 %v123, %v202
    %v204 = vpop.f32.mrb[0].mxu0
    %v205 = vadd.f32 %v127, %v204
    %206 = vmatprep.mubr.f32.mxu0 0.0
    %207 = vmatmul.mubr.f32.gmra.mrb[0].mxu0 %v84
    %v208 = vpop.f32.mrb[0].mxu0
    %v209 = vadd.f32 %v123, %v208
    %v210 = vpop.f32.mrb[0].mxu0
    %v211 = vadd.f32 %v127, %v210
    %212 = vmatprep.mubr.f32.mxu0 0.0
    %213 = vmatmul.mubr.f32.gmra.mrb[0].mxu0 %v85
    %v214 = vpop.f32.mrb[0].mxu0
    %v215 = vadd.f32 %v123, %v214
    %v216 = vpop.f32.mrb[0].mxu0
    %v217 = vadd.f32 %v127, %v216
    %218 = vdwg.mxu0
    %v219 = vmax.f32 %v197, 0.0
    %v220 = vmax.f32 %v199, 0.0
    %v221 = vmax.f32 %v203, 0.0
    %v222 = vmax.f32 %v205, 0.0
    %v223 = vmax.f32 %v209, 0.0
    %v224 = vmax.f32 %v211, 0.0
    %v225 = vmax.f32 %v215, 0.0
    %v226 = vmax.f32 %v217, 0.0
    %v227 = vld [vmem:[#allocation7] sm:$0xff]
    %v228 = vld [vmem:[#allocation7 + $0x8] sm:$0xff]
    %v229 = vld [vmem:[#allocation7 + $0x10] sm:$0xff]
    %v230 = vld [vmem:[#allocation7 + $0x18] sm:$0xff]
    %v231 = vld [vmem:[#allocation7 + $0x20] sm:$0xff]
    %v232 = vld [vmem:[#allocation7 + $0x28] sm:$0xff]
    %v233 = vld [vmem:[#allocation7 + $0x30] sm:$0xff]
    %v234 = vld [vmem:[#allocation7 + $0x38] sm:$0xff]
    %v235 = vld [vmem:[#allocation7 + $0x40] sm:$0xff]
    %v236 = vld [vmem:[#allocation7 + $0x48] sm:$0xff]
    %v237 = vld [vmem:[#allocation7 + $0x50] sm:$0xff]
    %v238 = vld [vmem:[#allocation7 + $0x58] sm:$0xff]
    %v239 = vld [vmem:[#allocation7 + $0x60] sm:$0xff]
    %v240 = vld [vmem:[#allocation7 + $0x68] sm:$0xff]
    %v241 = vld [vmem:[#allocation7 + $0x70] sm:$0xff]
    %v242 = vld [vmem:[#allocation7 + $0x78] sm:$0xff]
    %v243 = vld [vmem:[#allocation7 + $0x80] sm:$0xff]
    %v244 = vld [vmem:[#allocation7 + $0x88] sm:$0xff]
    %v245 = vld [vmem:[#allocation7 + $0x90] sm:$0xff]
    %v246 = vld [vmem:[#allocation7 + $0x98] sm:$0xff]
    %v247 = vld [vmem:[#allocation7 + $0xa0] sm:$0xff]
    %v248 = vld [vmem:[#allocation7 + $0xa8] sm:$0xff]
    %v249 = vld [vmem:[#allocation7 + $0xb0] sm:$0xff]
    %v250 = vld [vmem:[#allocation7 + $0xb8] sm:$0xff]
    %v251 = vld [vmem:[#allocation7 + $0xc0] sm:$0xff]
    %v252 = vld [vmem:[#allocation7 + $0xc8] sm:$0xff]
    %v253 = vld [vmem:[#allocation7 + $0xd0] sm:$0xff]
    %v254 = vld [vmem:[#allocation7 + $0xd8] sm:$0xff]
    %v255 = vld [vmem:[#allocation7 + $0xe0] sm:$0xff]
    %v256 = vld [vmem:[#allocation7 + $0xe8] sm:$0xff]
    %v257 = vld [vmem:[#allocation7 + $0xf0] sm:$0xff]
    %v258 = vld [vmem:[#allocation7 + $0xf8] sm:$0xff]
    %v259 = vld [vmem:[%s4] sm:$0x1]
    %v261 = vlaneseq
    %v262 = vshrl.u32 %v261, 7
    %v263 = vsub.s32 0, %v262
    %v264 = vrot.slane %v259, %v263
    %266 = vmatprep.subr.mxu0 0.0
    %267 = vmatpush1.msra.mxu0 %v227
    %268 = vmatprep.subr.mxu0 0.0
    %269 = vmatpush1.msra.mxu0 %v228
    %270 = vmatprep.subr.mxu0 0.0
    %271 = vmatpush1.msra.mxu0 %v229
    %272 = vmatprep.subr.mxu0 0.0
    %273 = vmatpush1.msra.mxu0 %v230
    %274 = vmatprep.subr.mxu0 0.0
    %275 = vmatpush1.msra.mxu0 %v231
    %276 = vmatprep.subr.mxu0 0.0
    %277 = vmatpush1.msra.mxu0 %v232
    %278 = vmatprep.subr.mxu0 0.0
    %279 = vmatpush1.msra.mxu0 %v233
    %280 = vmatprep.subr.mxu0 0.0
    %281 = vmatpush1.msra.mxu0 %v234
    %282 = vmatprep.subr.mxu0 0.0
    %283 = vmatpush1.msra.mxu0 %v235
    %284 = vmatprep.subr.mxu0 0.0
    %285 = vmatpush1.msra.mxu0 %v236
    %286 = vmatprep.subr.mxu0 0.0
    %287 = vmatpush1.msra.mxu0 %v237
    %288 = vmatprep.subr.mxu0 0.0
    %289 = vmatpush1.msra.mxu0 %v238
    %290 = vmatprep.subr.mxu0 0.0
    %291 = vmatpush1.msra.mxu0 %v239
    %292 = vmatprep.subr.mxu0 0.0
    %293 = vmatpush1.msra.mxu0 %v240
    %294 = vmatprep.subr.mxu0 0.0
    %295 = vmatpush1.msra.mxu0 %v241
    %296 = vmatprep.subr.mxu0 0.0
    %297 = vmatpush1.msra.mxu0 %v242
    %298 = vmatprep.subr.mxu0 0.0
    %299 = vmatpush1.msra.mxu0 %v243
    %300 = vmatprep.subr.mxu0 0.0
    %301 = vmatpush1.msra.mxu0 %v244
    %302 = vmatprep.subr.mxu0 0.0
    %303 = vmatpush1.msra.mxu0 %v245
    %304 = vmatprep.subr.mxu0 0.0
    %305 = vmatpush1.msra.mxu0 %v246
    %306 = vmatprep.subr.mxu0 0.0
    %307 = vmatpush1.msra.mxu0 %v247
    %308 = vmatprep.subr.mxu0 0.0
    %309 = vmatpush1.msra.mxu0 %v248
    %310 = vmatprep.subr.mxu0 0.0
    %311 = vmatpush1.msra.mxu0 %v249
    %312 = vmatprep.subr.mxu0 0.0
    %313 = vmatpush1.msra.mxu0 %v250
    %314 = vmatprep.subr.mxu0 0.0
    %315 = vmatpush1.msra.mxu0 %v251
    %316 = vmatprep.subr.mxu0 0.0
    %317 = vmatpush1.msra.mxu0 %v252
    %318 = vmatprep.subr.mxu0 0.0
    %319 = vmatpush1.msra.mxu0 %v253
    %320 = vmatprep.subr.mxu0 0.0
    %321 = vmatpush1.msra.mxu0 %v254
    %322 = vmatprep.subr.mxu0 0.0
    %323 = vmatpush1.msra.mxu0 %v255
    %324 = vmatprep.subr.mxu0 0.0
    %325 = vmatpush1.msra.mxu0 %v256
    %326 = vmatprep.subr.mxu0 0.0
    %327 = vmatpush1.msra.mxu0 %v257
    %328 = vmatprep.subr.mxu0 0.0
    %329 = vmatpush1.msra.mxu0 %v258
    %330 = vmatprep.mubr.f32.mxu0 %v220
    %331 = vmatmul.mubr.f32.gmra.mrb[0].mxu0 %v219
    %v332 = vpop.f32.mrb[0].mxu0
    %v333 = vadd.f32 %v264, %v332
    %v334 = vpop.f32.mrb[0].mxu0
    %335 = vmatprep.mubr.f32.mxu0 %v222
    %336 = vmatmul.mubr.f32.gmra.mrb[0].mxu0 %v221
    %v337 = vpop.f32.mrb[0].mxu0
    %v338 = vadd.f32 %v264, %v337
    %v339 = vpop.f32.mrb[0].mxu0
    %340 = vmatprep.mubr.f32.mxu0 %v224
    %341 = vmatmul.mubr.f32.gmra.mrb[0].mxu0 %v223
    %v342 = vpop.f32.mrb[0].mxu0
    %v343 = vadd.f32 %v264, %v342
    %v344 = vpop.f32.mrb[0].mxu0
    %345 = vmatprep.mubr.f32.mxu0 %v226
    %346 = vmatmul.mubr.f32.gmra.mrb[0].mxu0 %v225
    %v347 = vpop.f32.mrb[0].mxu0
    %v348 = vadd.f32 %v264, %v347
    %v349 = vpop.f32.mrb[0].mxu0
    %350 = vdwg.mxu0
    %v351 = vmax.f32 %v333, 0.0
    %v352 = vmax.f32 %v338, 0.0
    %v353 = vmax.f32 %v343, 0.0
    %v354 = vmax.f32 %v348, 0.0
    %v355 = vld [vmem:[#allocation8] sm:$0xff]
    %v356 = vld [vmem:[#allocation8 + $0x8] sm:$0xff]
    %v357 = vld [vmem:[#allocation8 + $0x10] sm:$0xff]
    %v358 = vld [vmem:[#allocation8 + $0x18] sm:$0xff]
    %v359 = vld [vmem:[#allocation8 + $0x20] sm:$0xff]
    %v360 = vld [vmem:[#allocation8 + $0x28] sm:$0xff]
    %v361 = vld [vmem:[#allocation8 + $0x30] sm:$0xff]
    %v362 = vld [vmem:[#allocation8 + $0x38] sm:$0xff]
    %v363 = vld [vmem:[#allocation8 + $0x40] sm:$0xff]
    %v364 = vld [vmem:[#allocation8 + $0x48] sm:$0xff]
    %v365 = vld [vmem:[#allocation8 + $0x50] sm:$0xff]
    %v366 = vld [vmem:[#allocation8 + $0x58] sm:$0xff]
    %v367 = vld [vmem:[#allocation8 + $0x60] sm:$0xff]
    %v368 = vld [vmem:[#allocation8 + $0x68] sm:$0xff]
    %v369 = vld [vmem:[#allocation8 + $0x70] sm:$0xff]
    %v370 = vld [vmem:[#allocation8 + $0x78] sm:$0xff]
    %v371 = vld [vmem:[#allocation8 + $0x80] sm:$0xff]
    %v372 = vld [vmem:[#allocation8 + $0x88] sm:$0xff]
    %v373 = vld [vmem:[#allocation8 + $0x90] sm:$0xff]
    %v374 = vld [vmem:[#allocation8 + $0x98] sm:$0xff]
    %v375 = vld [vmem:[#allocation8 + $0xa0] sm:$0xff]
    %v376 = vld [vmem:[#allocation8 + $0xa8] sm:$0xff]
    %v377 = vld [vmem:[#allocation8 + $0xb0] sm:$0xff]
    %v378 = vld [vmem:[#allocation8 + $0xb8] sm:$0xff]
    %v379 = vld [vmem:[#allocation8 + $0xc0] sm:$0xff]
    %v380 = vld [vmem:[#allocation8 + $0xc8] sm:$0xff]
    %v381 = vld [vmem:[#allocation8 + $0xd0] sm:$0xff]
    %v382 = vld [vmem:[#allocation8 + $0xd8] sm:$0xff]
    %v383 = vld [vmem:[#allocation8 + $0xe0] sm:$0xff]
    %v384 = vld [vmem:[#allocation8 + $0xe8] sm:$0xff]
    %v385 = vld [vmem:[#allocation8 + $0xf0] sm:$0xff]
    %v386 = vld [vmem:[#allocation8 + $0xf8] sm:$0xff]
    %v387 = vld [vmem:[#allocation8 + $0x100] sm:$0xff]
    %v388 = vld [vmem:[#allocation8 + $0x108] sm:$0xff]
    %v389 = vld [vmem:[#allocation8 + $0x110] sm:$0xff]
    %v390 = vld [vmem:[#allocation8 + $0x118] sm:$0xff]
    %v391 = vld [vmem:[#allocation8 + $0x120] sm:$0xff]
    %v392 = vld [vmem:[#allocation8 + $0x128] sm:$0xff]
    %v393 = vld [vmem:[#allocation8 + $0x130] sm:$0xff]
    %v394 = vld [vmem:[#allocation8 + $0x138] sm:$0xff]
    %v395 = vld [vmem:[#allocation8 + $0x140] sm:$0xff]
    %v396 = vld [vmem:[#allocation8 + $0x148] sm:$0xff]
    %v397 = vld [vmem:[#allocation8 + $0x150] sm:$0xff]
    %v398 = vld [vmem:[#allocation8 + $0x158] sm:$0xff]
    %v399 = vld [vmem:[#allocation8 + $0x160] sm:$0xff]
    %v400 = vld [vmem:[#allocation8 + $0x168] sm:$0xff]
    %v401 = vld [vmem:[#allocation8 + $0x170] sm:$0xff]
    %v402 = vld [vmem:[#allocation8 + $0x178] sm:$0xff]
    %v403 = vld [vmem:[#allocation8 + $0x180] sm:$0xff]
    %v404 = vld [vmem:[#allocation8 + $0x188] sm:$0xff]
    %v405 = vld [vmem:[#allocation8 + $0x190] sm:$0xff]
    %v406 = vld [vmem:[#allocation8 + $0x198] sm:$0xff]
    %v407 = vld [vmem:[#allocation8 + $0x1a0] sm:$0xff]
    %v408 = vld [vmem:[#allocation8 + $0x1a8] sm:$0xff]
    %v409 = vld [vmem:[#allocation8 + $0x1b0] sm:$0xff]
    %v410 = vld [vmem:[#allocation8 + $0x1b8] sm:$0xff]
    %v411 = vld [vmem:[#allocation8 + $0x1c0] sm:$0xff]
    %v412 = vld [vmem:[#allocation8 + $0x1c8] sm:$0xff]
    %v413 = vld [vmem:[#allocation8 + $0x1d0] sm:$0xff]
    %v414 = vld [vmem:[#allocation8 + $0x1d8] sm:$0xff]
    %v415 = vld [vmem:[#allocation8 + $0x1e0] sm:$0xff]
    %v416 = vld [vmem:[#allocation8 + $0x1e8] sm:$0xff]
    %v417 = vld [vmem:[#allocation8 + $0x1f0] sm:$0xff]
    %v418 = vld [vmem:[#allocation8 + $0x1f8] sm:$0xff]
    %v419 = vld [vmem:[%s6] sm:$0xf]
    %v421 = vlaneseq
    %v422 = vshrl.u32 %v421, 7
    %v423 = vsub.s32 0, %v422
    %v424 = vrot.slane %v419, %v423
    %v425 = vlaneseq
    %v426 = vshrl.u32 %v425, 7
    %v427 = vsub.s32 1, %v426
    %v428 = vrot.slane %v419, %v427
    %v429 = vlaneseq
    %v430 = vshrl.u32 %v429, 7
    %v431 = vsub.s32 2, %v430
    %v432 = vrot.slane %v419, %v431
    %v433 = vlaneseq
    %v434 = vshrl.u32 %v433, 7
    %v435 = vsub.s32 3, %v434
    %v436 = vrot.slane %v419, %v435
    %441 = vmatprep.subr.mxu0 %v356
    %442 = vmatpush1.msra.mxu0 %v355
    %443 = vmatprep.subr.mxu0 %v360
    %444 = vmatpush1.msra.mxu0 %v359
    %445 = vmatprep.subr.mxu0 %v364
    %446 = vmatpush1.msra.mxu0 %v363
    %447 = vmatprep.subr.mxu0 %v368
    %448 = vmatpush1.msra.mxu0 %v367
    %449 = vmatprep.subr.mxu0 %v372
    %450 = vmatpush1.msra.mxu0 %v371
    %451 = vmatprep.subr.mxu0 %v376
    %452 = vmatpush1.msra.mxu0 %v375
    %453 = vmatprep.subr.mxu0 %v380
    %454 = vmatpush1.msra.mxu0 %v379
    %455 = vmatprep.subr.mxu0 %v384
    %456 = vmatpush1.msra.mxu0 %v383
    %457 = vmatprep.subr.mxu0 %v388
    %458 = vmatpush1.msra.mxu0 %v387
    %459 = vmatprep.subr.mxu0 %v392
    %460 = vmatpush1.msra.mxu0 %v391
    %461 = vmatprep.subr.mxu0 %v396
    %462 = vmatpush1.msra.mxu0 %v395
    %463 = vmatprep.subr.mxu0 %v400
    %464 = vmatpush1.msra.mxu0 %v399
    %465 = vmatprep.subr.mxu0 %v404
    %466 = vmatpush1.msra.mxu0 %v403
    %467 = vmatprep.subr.mxu0 %v408
    %468 = vmatpush1.msra.mxu0 %v407
    %469 = vmatprep.subr.mxu0 %v412
    %470 = vmatpush1.msra.mxu0 %v411
    %471 = vmatprep.subr.mxu0 %v416
    %472 = vmatpush1.msra.mxu0 %v415
    %473 = vmatprep.subr.mxu0 0.0
    %474 = vmatpush1.msra.mxu0 0.0
    %475 = vmatprep.subr.mxu0 0.0
    %476 = vmatpush1.msra.mxu0 0.0
    %477 = vmatprep.subr.mxu0 0.0
    %478 = vmatpush1.msra.mxu0 0.0
    %479 = vmatprep.subr.mxu0 0.0
    %480 = vmatpush1.msra.mxu0 0.0
    %481 = vmatprep.subr.mxu0 0.0
    %482 = vmatpush1.msra.mxu0 0.0
    %483 = vmatprep.subr.mxu0 0.0
    %484 = vmatpush1.msra.mxu0 0.0
    %485 = vmatprep.subr.mxu0 0.0
    %486 = vmatpush1.msra.mxu0 0.0
    %487 = vmatprep.subr.mxu0 0.0
    %488 = vmatpush1.msra.mxu0 0.0
    %489 = vmatprep.subr.mxu0 0.0
    %490 = vmatpush1.msra.mxu0 0.0
    %491 = vmatprep.subr.mxu0 0.0
    %492 = vmatpush1.msra.mxu0 0.0
    %493 = vmatprep.subr.mxu0 0.0
    %494 = vmatpush1.msra.mxu0 0.0
    %495 = vmatprep.subr.mxu0 0.0
    %496 = vmatpush1.msra.mxu0 0.0
    %497 = vmatprep.subr.mxu0 0.0
    %498 = vmatpush1.msra.mxu0 0.0
    %499 = vmatprep.subr.mxu0 0.0
    %500 = vmatpush1.msra.mxu0 0.0
    %501 = vmatprep.subr.mxu0 0.0
    %502 = vmatpush1.msra.mxu0 0.0
    %503 = vmatprep.subr.mxu0 0.0
    %504 = vmatpush1.msra.mxu0 0.0
    %505 = vmatprep.mubr.f32.mxu0 0.0
    %506 = vmatmul.mubr.f32.gmra.mrb[0].mxu0 %v351
    %v507 = vpop.f32.mrb[0].mxu0
    %v508 = vadd.f32 %v424, %v507
    %v509 = vpop.f32.mrb[0].mxu0
    %v510 = vadd.f32 %v428, %v509
    %511 = vmatprep.mubr.f32.mxu0 0.0
    %512 = vmatmul.mubr.f32.gmra.mrb[0].mxu0 %v352
    %v513 = vpop.f32.mrb[0].mxu0
    %v514 = vadd.f32 %v424, %v513
    %v515 = vpop.f32.mrb[0].mxu0
    %v516 = vadd.f32 %v428, %v515
    %517 = vmatprep.mubr.f32.mxu0 0.0
    %518 = vmatmul.mubr.f32.gmra.mrb[0].mxu0 %v353
    %v519 = vpop.f32.mrb[0].mxu0
    %v520 = vadd.f32 %v424, %v519
    %v521 = vpop.f32.mrb[0].mxu0
    %v522 = vadd.f32 %v428, %v521
    %523 = vmatprep.mubr.f32.mxu0 0.0
    %524 = vmatmul.mubr.f32.gmra.mrb[0].mxu0 %v354
    %v525 = vpop.f32.mrb[0].mxu0
    %v526 = vadd.f32 %v424, %v525
    %v527 = vpop.f32.mrb[0].mxu0
    %v528 = vadd.f32 %v428, %v527
    %529 = vdwg.mxu0
    %530 = vmatprep.subr.mxu0 %v358
    %531 = vmatpush1.msra.mxu0 %v357
    %532 = vmatprep.subr.mxu0 %v362
    %533 = vmatpush1.msra.mxu0 %v361
    %534 = vmatprep.subr.mxu0 %v366
    %535 = vmatpush1.msra.mxu0 %v365
    %536 = vmatprep.subr.mxu0 %v370
    %537 = vmatpush1.msra.mxu0 %v369
    %538 = vmatprep.subr.mxu0 %v374
    %539 = vmatpush1.msra.mxu0 %v373
    %540 = vmatprep.subr.mxu0 %v378
    %541 = vmatpush1.msra.mxu0 %v377
    %542 = vmatprep.subr.mxu0 %v382
    %543 = vmatpush1.msra.mxu0 %v381
    %544 = vmatprep.subr.mxu0 %v386
    %545 = vmatpush1.msra.mxu0 %v385
    %546 = vmatprep.subr.mxu0 %v390
    %547 = vmatpush1.msra.mxu0 %v389
    %548 = vmatprep.subr.mxu0 %v394
    %549 = vmatpush1.msra.mxu0 %v393
    %550 = vmatprep.subr.mxu0 %v398
    %551 = vmatpush1.msra.mxu0 %v397
    %552 = vmatprep.subr.mxu0 %v402
    %553 = vmatpush1.msra.mxu0 %v401
    %554 = vmatprep.subr.mxu0 %v406
    %555 = vmatpush1.msra.mxu0 %v405
    %556 = vmatprep.subr.mxu0 %v410
    %557 = vmatpush1.msra.mxu0 %v409
    %558 = vmatprep.subr.mxu0 %v414
    %559 = vmatpush1.msra.mxu0 %v413
    %560 = vmatprep.subr.mxu0 %v418
    %561 = vmatpush1.msra.mxu0 %v417
    %562 = vmatprep.subr.mxu0 0.0
    %563 = vmatpush1.msra.mxu0 0.0
    %564 = vmatprep.subr.mxu0 0.0
    %565 = vmatpush1.msra.mxu0 0.0
    %566 = vmatprep.subr.mxu0 0.0
    %567 = vmatpush1.msra.mxu0 0.0
    %568 = vmatprep.subr.mxu0 0.0
    %569 = vmatpush1.msra.mxu0 0.0
    %570 = vmatprep.subr.mxu0 0.0
    %571 = vmatpush1.msra.mxu0 0.0
    %572 = vmatprep.subr.mxu0 0.0
    %573 = vmatpush1.msra.mxu0 0.0
    %574 = vmatprep.subr.mxu0 0.0
    %575 = vmatpush1.msra.mxu0 0.0
    %576 = vmatprep.subr.mxu0 0.0
    %577 = vmatpush1.msra.mxu0 0.0
    %578 = vmatprep.subr.mxu0 0.0
    %579 = vmatpush1.msra.mxu0 0.0
    %580 = vmatprep.subr.mxu0 0.0
    %581 = vmatpush1.msra.mxu0 0.0
    %582 = vmatprep.subr.mxu0 0.0
    %583 = vmatpush1.msra.mxu0 0.0
    %584 = vmatprep.subr.mxu0 0.0
    %585 = vmatpush1.msra.mxu0 0.0
    %586 = vmatprep.subr.mxu0 0.0
    %587 = vmatpush1.msra.mxu0 0.0
    %588 = vmatprep.subr.mxu0 0.0
    %589 = vmatpush1.msra.mxu0 0.0
    %590 = vmatprep.subr.mxu0 0.0
    %591 = vmatpush1.msra.mxu0 0.0
    %592 = vmatprep.subr.mxu0 0.0
    %593 = vmatpush1.msra.mxu0 0.0
    %594 = vmatprep.mubr.f32.mxu0 0.0
    %595 = vmatmul.mubr.f32.gmra.mrb[0].mxu0 %v351
    %v596 = vpop.f32.mrb[0].mxu0
    %v597 = vadd.f32 %v432, %v596
    %v598 = vpop.f32.mrb[0].mxu0
    %v599 = vadd.f32 %v436, %v598
    %600 = vmatprep.mubr.f32.mxu0 0.0
    %601 = vmatmul.mubr.f32.gmra.mrb[0].mxu0 %v352
    %v602 = vpop.f32.mrb[0].mxu0
    %v603 = vadd.f32 %v432, %v602
    %v604 = vpop.f32.mrb[0].mxu0
    %v605 = vadd.f32 %v436, %v604
    %606 = vmatprep.mubr.f32.mxu0 0.0
    %607 = vmatmul.mubr.f32.gmra.mrb[0].mxu0 %v353
    %v608 = vpop.f32.mrb[0].mxu0
    %v609 = vadd.f32 %v432, %v608
    %v610 = vpop.f32.mrb[0].mxu0
    %v611 = vadd.f32 %v436, %v610
    %612 = vmatprep.mubr.f32.mxu0 0.0
    %613 = vmatmul.mubr.f32.gmra.mrb[0].mxu0 %v354
    %v614 = vpop.f32.mrb[0].mxu0
    %v615 = vadd.f32 %v432, %v614
    %v616 = vpop.f32.mrb[0].mxu0
    %v617 = vadd.f32 %v436, %v616
    %618 = vdwg.mxu0
    %v619 = vmax.f32 %v508, 0.0
    %v620 = vmax.f32 %v510, 0.0
    %v621 = vmax.f32 %v597, 0.0
    %v622 = vmax.f32 %v599, 0.0
    %v623 = vmax.f32 %v514, 0.0
    %v624 = vmax.f32 %v516, 0.0
    %v625 = vmax.f32 %v603, 0.0
    %v626 = vmax.f32 %v605, 0.0
    %v627 = vmax.f32 %v520, 0.0
    %v628 = vmax.f32 %v522, 0.0
    %v629 = vmax.f32 %v609, 0.0
    %v630 = vmax.f32 %v611, 0.0
    %v631 = vmax.f32 %v526, 0.0
    %v632 = vmax.f32 %v528, 0.0
    %v633 = vmax.f32 %v615, 0.0
    %v634 = vmax.f32 %v617, 0.0
    %635 = vst [vmem:[#allocation10] sm:$0xff] %v619
    %636 = vst [vmem:[#allocation10 + $0x8] sm:$0xff] %v620
    %637 = vst [vmem:[#allocation10 + $0x10] sm:$0xff] %v621
    %638 = vst [vmem:[#allocation10 + $0x18] sm:$0xff] %v622
    %639 = vst [vmem:[#allocation10 + $0x20] sm:$0xff] %v623
    %640 = vst [vmem:[#allocation10 + $0x28] sm:$0xff] %v624
    %641 = vst [vmem:[#allocation10 + $0x30] sm:$0xff] %v625
    %642 = vst [vmem:[#allocation10 + $0x38] sm:$0xff] %v626
    %643 = vst [vmem:[#allocation10 + $0x40] sm:$0xff] %v627
    %644 = vst [vmem:[#allocation10 + $0x48] sm:$0xff] %v628
    %645 = vst [vmem:[#allocation10 + $0x50] sm:$0xff] %v629
    %646 = vst [vmem:[#allocation10 + $0x58] sm:$0xff] %v630
    %647 = vst [vmem:[#allocation10 + $0x60] sm:$0xff] %v631
    %648 = vst [vmem:[#allocation10 + $0x68] sm:$0xff] %v632
    %649 = vst [vmem:[#allocation10 + $0x70] sm:$0xff] %v633
    %650 = vst [vmem:[#allocation10 + $0x78] sm:$0xff] %v634
    // Predicated region
    $region46: #{tpu_custom_call.1} parent=1 // pred_check
      _
    $region47: #{tpu_custom_call.1} parent=1 // pred_check_branch
      %652 = sbr.rel (0) target = $region49
    $region48: #{tpu_custom_call.1} parent=1 // pred_region
      %s654 = ssub.s32 2048, 2048
      %655 = vsyncadd [#allocation4], %s654
      %s656 = sshll.u32 [#allocation10], 4
      %s657 = int_to_ptr.vmem [resolvable:$true] %s656
      %662 = dma.vmem_to_hbm [thread:$0]  %s657, 2048, %s7, [#allocation4], 512, 512, 32
    $region49: #{tpu_custom_call.1} parent=1 // pred_fallthru
      _
    // Predicated region
    $region50: #{tpu_custom_call.1} parent=1 // pred_check
      _
    $region51: #{tpu_custom_call.1} parent=1 // pred_check_branch
      %664 = sbr.rel (0) target = $region53
    $region52: #{tpu_custom_call.1} parent=1 // pred_region
      %665 = dma.done [#allocation4], 2048
    $region53: #{tpu_custom_call.1} parent=1 // pred_fallthru
      _
    %666 = vsyncpa [#allocation3], 1
    %667 = vsyncpa [#allocation6], 1
    %668 = vsyncpa [#allocation9], 1
    %669 = vsyncpa [#allocation4], 1

</llo_original>
